<compile_context>
chip_gen: v5e
topology: v5e:2x2
jax: 0.10.0
libtpu: 0.0.40
codegen_flags: <defaults>
</compile_context>

<pallas_src>
import functools

import numpy as np
import jax
import jax.numpy as jnp
from jax.experimental import pallas as pl
from jax.experimental.pallas import tpu as pltpu


def _drop_path_kernel(rand_ref, x_ref, o_ref, *, inv_keep_prob):
    # rand_ref: (bm, 1) f32 holding keep_prob + U[0,1) per sample.
    # floor() -> {0., 1.} Bernoulli(keep_prob) mask; fold in the 1/keep_prob
    # scale so the whole op is one broadcasted VPU multiply per tile.
    scale = jnp.floor(rand_ref[...]) * inv_keep_prob          # (bm, 1) f32
    o_ref[...] = (x_ref[...].astype(jnp.float32) * scale).astype(o_ref.dtype)


def drop_path(x, drop_prob, *, key=None, rand=None,
              max_block_rows=256, max_block_cols=32768):
    """Pallas DropPath.

    `rand` (shape (N,)) must equal keep_prob + U[0,1); if None it is drawn
    from `key`.  drop_prob == 0.0 is an identity, as in the PyTorch module.
    """
    if drop_prob == 0.0:
        return x
    keep_prob = 1.0 - drop_prob
    N = x.shape[0]
    if rand is None:
        if key is None:
            raise ValueError("drop_path needs `key` or a precomputed `rand`")
        rand = keep_prob + jax.random.uniform(key, (N,), dtype=jnp.float32)

    # Lane-dense flattening done in the wrapper, not the kernel.
    F = int(np.prod(x.shape[1:])) if x.ndim > 1 else 1
    x2 = x.reshape(N, F)
    rand2 = jnp.asarray(rand, jnp.float32).reshape(N, 1)

    # Block shapes: full dim when small (always legal), else an (8,128)-aligned
    # tile; ragged edges are handled by Pallas' block masking.
    bm = N if N <= max_block_rows else max_block_rows          # multiple of 8 when tiled
    bn = F if F <= max_block_cols else max_block_cols          # multiple of 128 when tiled
    grid = (pl.cdiv(N, bm), pl.cdiv(F, bn))

    kernel = functools.partial(_drop_path_kernel, inv_keep_prob=1.0 / keep_prob)
    out = pl.pallas_call(
        kernel,
        out_shape=jax.ShapeDtypeStruct((N, F), x.dtype),
        grid=grid,
        in_specs=[
            pl.BlockSpec((bm, 1), lambda i, j: (i, 0)),        # per-sample rand
            pl.BlockSpec((bm, bn), lambda i, j: (i, j)),       # x tile
        ],
        out_specs=pl.BlockSpec((bm, bn), lambda i, j: (i, j)),
        compiler_params=pltpu.CompilerParams(
            dimension_semantics=("parallel", "parallel")),
    )(rand2, x2)
    return out.reshape(x.shape)


def reference(x, drop_prob, rand):
    """Pure-JAX reference with the exact PyTorch forward semantics."""
    if drop_prob == 0.0:
        return x
    keep_prob = 1.0 - drop_prob
    shape = (x.shape[0],) + (1,) * (x.ndim - 1)
    mask = jnp.floor(rand).reshape(shape)
    return x / keep_prob * mask


if __name__ == "__main__":
    key = jax.random.PRNGKey(0)
    kx, kr = jax.random.split(key)

    N, C, H, W = 2, 4, 16, 16
    drop_prob = 0.25
    keep_prob = 1.0 - drop_prob

    x = jax.random.normal(kx, (N, C, H, W), jnp.float32)
    # Same per-sample random tensor for kernel and reference -> deterministic check.
    rand = keep_prob + jax.random.uniform(kr, (N,), dtype=jnp.float32)

    y = drop_path(x, drop_prob, rand=rand)
    y = jax.block_until_ready(y)

    y_ref = reference(x, drop_prob, rand)
    np.testing.assert_allclose(np.asarray(y), np.asarray(y_ref),
                               rtol=1e-6, atol=1e-6)

    # drop_prob == 0 path: identity, no kernel launch (matches the module).
    y0 = drop_path(x, 0.0)
    np.testing.assert_allclose(np.asarray(y0), np.asarray(x))

    print("KERNEL_OK")
</pallas_src>

<mosaic_0001>
module attributes {stable_mosaic.version = 11 : i64} {
  func.func @_drop_path_kernel(%arg0: i32, %arg1: i32, %arg2: memref<2x1xf32, #tpu.memory_space<vmem>>, %arg3: memref<2x1024xf32, #tpu.memory_space<vmem>>, %arg4: memref<2x1024xf32, #tpu.memory_space<vmem>>) attributes {dimension_semantics = [#tpu.dimension_semantics<parallel>, #tpu.dimension_semantics<parallel>], iteration_bounds = array<i64: 1, 1>, scalar_prefetch = 0 : i64, scratch_operands = 0 : i64, tpu.core_type = #tpu.core_type<tc>, window_params = [{transform_indices = @transform_0, window_bounds = array<i64: 2, 1>}, {transform_indices = @transform_1, window_bounds = array<i64: 2, 1024>}, {transform_indices = @transform_2, window_bounds = array<i64: 2, 1024>}]} {
    %c0 = arith.constant 0 : index
    %c0_0 = arith.constant 0 : index
    %0 = vector.load %arg2[%c0, %c0_0] : memref<2x1xf32, #tpu.memory_space<vmem>>, vector<2x1xf32>
    %1 = math.floor %0 : vector<2x1xf32>
    %cst = arith.constant 1.33333337 : f32
    %2 = vector.broadcast %cst : f32 to vector<2x1xf32>
    %3 = arith.mulf %1, %2 : vector<2x1xf32>
    %c0_1 = arith.constant 0 : index
    %c0_2 = arith.constant 0 : index
    %4 = vector.load %arg3[%c0_1, %c0_2] : memref<2x1024xf32, #tpu.memory_space<vmem>>, vector<2x1024xf32>
    %5 = vector.broadcast %3 : vector<2x1xf32> to vector<2x1024xf32>
    %6 = arith.mulf %4, %5 : vector<2x1024xf32>
    %c0_3 = arith.constant 0 : index
    %c0_4 = arith.constant 0 : index
    %7 = vector.load %arg4[%c0_3, %c0_4] : memref<2x1024xf32, #tpu.memory_space<vmem>>, vector<2x1024xf32>
    tpu.vector_store %arg4[%c0_3, %c0_4], %6 {strides = array<i32>} : memref<2x1024xf32, #tpu.memory_space<vmem>>, vector<2x1024xf32>,
    return
  }
  func.func @transform_0(%arg0: i32, %arg1: i32) -> (i32, i32) {
    %c0_i32 = arith.constant 0 : i32
    %c0_i32_0 = arith.constant 0 : i32
    return %arg0, %c0_i32 : i32, i32
  }
  func.func @transform_1(%arg0: i32, %arg1: i32) -> (i32, i32) {
    %c0_i32 = arith.constant 0 : i32
    return %arg0, %arg1 : i32, i32
  }
  func.func @transform_2(%arg0: i32, %arg1: i32) -> (i32, i32) {
    %c0_i32 = arith.constant 0 : i32
    return %arg0, %arg1 : i32, i32
  }
}

</mosaic_0001>

<llo_original>
// kernel: tpu_custom_call.1
$region0: #{tpu_custom_call.1}
  #allocation0 [shape = 'u32[]', space=smem, size = 0x4, offset = 0x4, fixed_abs, tag = 'smem constant byte address 0x4 - core index']
  #allocation1 [shape = 'u32[72,128]{1,0:T(1,128)}', space=vmem, size = 0x9000, scoped, tag = 'internal scratch']
  %s0 = inlined_call_operand.vmem [shape: f32[2,1], index: 0, kind: input, shape index: {}]
  %s1 = inlined_call_operand.hbm [shape: f32[2,1024], index: 1, kind: input, shape index: {}]
  %s2 = inlined_call_operand.hbm [shape: f32[2,1024], index: 2, kind: output, shape index: {}]
  %s3 = sld [smem:[#allocation0]]
  $region22: #{tpu_custom_call.1} parent=0
    _
  %s5 = ssub.s32 1, %s3
  %s6 = scalar_select 0, %s5, %s3
  $region1: #{tpu_custom_call.1} parent=0
    #allocation2 [shape = 'u8[8192]{0}', space=vmem, size = 0x2000, scoped, tag = 'input window, operand 1, single buffered']
    #allocation3 [shape = 's32[1]{0}', space=sflag, size = 0x4, scoped, tag = 'scoped memory for tpu_custom_call.1']
    #allocation4 [shape = 's32[1]{0}', space=sflag, size = 0x4, scoped, tag = 'scoped memory for tpu_custom_call.1']
    #allocation5 [shape = 'u8[8192]{0}', space=vmem, size = 0x2000, scoped, tag = 'output window, operand 0, single buffered']
    %7 = vsyncpa [#allocation3], 0
    %8 = vsyncpa [#allocation4], 0
    // Predicated region
    $region2: #{tpu_custom_call.1} parent=1 // pred_check
      _
    $region3: #{tpu_custom_call.1} parent=1 // pred_check_branch
      %10 = sbr.rel (0) target = $region5
    $region4: #{tpu_custom_call.1} parent=1 // pred_region
      _
    $region5: #{tpu_custom_call.1} parent=1 // pred_fallthru
      _
    // Predicated region
    $region6: #{tpu_custom_call.1} parent=1 // pred_check
      _
    $region7: #{tpu_custom_call.1} parent=1 // pred_check_branch
      %12 = sbr.rel (0) target = $region9
    $region8: #{tpu_custom_call.1} parent=1 // pred_region
      %14 = vsyncadd [#allocation3], 0
      %s16 = sshll.u32 %s1, 4
      %s17 = int_to_ptr.hbm [resolvable:$true] %s16
      %s18 = sshll.u32 [#allocation2], 4
      %s19 = int_to_ptr.vmem [resolvable:$true] %s18
      %21 = dma.hbm_to_vmem [thread:$0]  %s17, 256, %s19, [#allocation3]
    $region9: #{tpu_custom_call.1} parent=1 // pred_fallthru
      _
    // Predicated region
    $region10: #{tpu_custom_call.1} parent=1 // pred_check
      _
    $region11: #{tpu_custom_call.1} parent=1 // pred_check_branch
      %23 = sbr.rel (0) target = $region13
    $region12: #{tpu_custom_call.1} parent=1 // pred_region
      %25 = dma.done [#allocation3], 256
    $region13: #{tpu_custom_call.1} parent=1 // pred_fallthru
      _
    %v26 = vld [vmem:[%s0] sm:$0x3]
    %v27 = vfloor.f32 %v26
    %v28 = vmul.f32 %v27, 1.3333334
    %v29 = vld [vmem:[#allocation2] sm:$0xff]
    %v30 = vld [vmem:[#allocation2 + $0x8] sm:$0xff]
    %32 = vset.pattern.permute.xlu0 0
    %33 = vperm.xlu0 %32, %v28
    %v34 = vpop.permute.xlu0 %33
    %v36 = vunpack.c.l.s4 269488144
    %v37 = vunpack.c.0.s8 %v36
    %v38 = vperm.slane %v34, %v37
    %v40 = vmul.f32 %v29, %v38
    %v41 = vmul.f32 %v30, %v38
    %42 = vst [vmem:[#allocation5] sm:$0xff] %v40
    %43 = vst [vmem:[#allocation5 + $0x8] sm:$0xff] %v41
    // Predicated region
    $region14: #{tpu_custom_call.1} parent=1 // pred_check
      _
    $region15: #{tpu_custom_call.1} parent=1 // pred_check_branch
      %45 = sbr.rel (0) target = $region17
    $region16: #{tpu_custom_call.1} parent=1 // pred_region
      %47 = vsyncadd [#allocation4], 0
      %s49 = sshll.u32 [#allocation5], 4
      %s50 = int_to_ptr.vmem [resolvable:$true] %s49
      %s51 = sshll.u32 %s2, 4
      %s52 = int_to_ptr.hbm [resolvable:$true] %s51
      %54 = dma.vmem_to_hbm [thread:$0]  %s50, 256, %s52, [#allocation4]
    $region17: #{tpu_custom_call.1} parent=1 // pred_fallthru
      _
    // Predicated region
    $region18: #{tpu_custom_call.1} parent=1 // pred_check
      _
    $region19: #{tpu_custom_call.1} parent=1 // pred_check_branch
      %56 = sbr.rel (0) target = $region21
    $region20: #{tpu_custom_call.1} parent=1 // pred_region
      %58 = dma.done [#allocation4], 256
    $region21: #{tpu_custom_call.1} parent=1 // pred_fallthru
      _
    %59 = vsyncpa [#allocation3], 1
    %60 = vsyncpa [#allocation4], 1

</llo_original>
